<compile_context>
chip_gen: v5e
topology: v5e:2x2
jax: 0.10.0
libtpu: 0.0.40
codegen_flags: <defaults>
</compile_context>

<pallas_src>
import math

import jax
import jax.numpy as jnp
from jax import lax
from jax.experimental import pallas as pl
from jax.experimental.pallas import tpu as pltpu

LN_EPS = 1e-12  # ESM1bLayerNorm default eps


def _round_up(x, m):
    return (x + m - 1) // m * m


def _top_layer_kernel(x_ref, w1_ref, b1_ref, g_ref, beta_ref, w2_ref, b2_ref, o_ref):
    # x_ref:    (tm, D_in)        stored dtype (f32 / bf16)
    # w1_ref:   (D_in, D_emb)     stored dtype, resident in VMEM
    # b1_ref:   (1, D_emb)        f32 (pre-cast in wrapper)
    # g_ref:    (1, D_emb)        f32 LayerNorm scale
    # beta_ref: (1, D_emb)        f32 LayerNorm shift
    # w2_ref:   (D_emb, D_out_p)  stored dtype (zero-padded columns)
    # b2_ref:   (1, D_out_p)      f32 (zero-padded)
    # o_ref:    (tm, D_out_p)

    # Linear 1 on the MXU: operands kept in stored dtype, f32 accumulation.
    h = jnp.dot(x_ref[...], w1_ref[...],
                preferred_element_type=jnp.float32) + b1_ref[...]

    # Exact (erf-based) GELU — matches torch.nn.GELU() default.
    inv_sqrt2 = jnp.float32(1.0 / math.sqrt(2.0))
    h = 0.5 * h * (1.0 + lax.erf(h * inv_sqrt2))

    # LayerNorm over the embed dim (f32 math, eps=1e-12, affine).
    mu = jnp.mean(h, axis=-1, keepdims=True)
    diff = h - mu
    var = jnp.mean(diff * diff, axis=-1, keepdims=True)
    hn = diff * lax.rsqrt(var + jnp.float32(LN_EPS))
    hn = hn * g_ref[...] + beta_ref[...]

    # Linear 2 on the MXU: cast activation to the weight dtype (no-op for f32,
    # bf16 fast path for bf16 weights), f32 accumulation.
    out = jnp.dot(hn.astype(w2_ref.dtype), w2_ref[...],
                  preferred_element_type=jnp.float32) + b2_ref[...]

    o_ref[...] = out.astype(o_ref.dtype)


def top_layer_pallas(features, params, *, tm=256):
    """features: (batch, seq, D_in) -> (batch, seq, D_out)."""
    w1, b1, g, beta, w2, b2 = (params[k] for k in ("w1", "b1", "g", "beta", "w2", "b2"))
    B, S, D_in = features.shape
    D_emb = w1.shape[1]
    D_out = w2.shape[1]
    M = B * S

    # Row tiling: large tiles; shrink for tiny inputs and pad M to a multiple.
    tm_eff = min(tm, _round_up(M, 8))
    M_pad = _round_up(M, tm_eff)

    # Lane-dense output: pad D_out up to a multiple of 128 (zero columns).
    D_out_p = _round_up(D_out, 128)

    x2d = features.reshape(M, D_in)
    if M_pad != M:
        x2d = jnp.pad(x2d, ((0, M_pad - M), (0, 0)))

    if D_out_p != D_out:
        w2p = jnp.pad(w2, ((0, 0), (0, D_out_p - D_out)))
        b2p = jnp.pad(b2, (0, D_out_p - D_out))
    else:
        w2p, b2p = w2, b2

    # Pre-cast bias / LayerNorm params to f32 once (hoisted out of the kernel).
    b1_2d = b1.astype(jnp.float32).reshape(1, D_emb)
    g_2d = g.astype(jnp.float32).reshape(1, D_emb)
    beta_2d = beta.astype(jnp.float32).reshape(1, D_emb)
    b2_2d = b2p.astype(jnp.float32).reshape(1, D_out_p)

    grid = (M_pad // tm_eff,)
    full = lambda shape: pl.BlockSpec(shape, lambda i: (0, 0))

    # VMEM budget: streamed tiles are double-buffered, weights resident (x2 by
    # the default pipeline), f32 intermediates; clamp to fit v7x's 64 MiB.
    isz = jnp.dtype(features.dtype).itemsize
    wsz = jnp.dtype(w1.dtype).itemsize
    vmem_needed = (
        2 * tm_eff * (D_in + D_out_p) * isz                 # streamed x / out tiles
        + 2 * (D_in * D_emb + D_emb * D_out_p) * wsz        # resident weights
        + 4 * (3 * D_emb + D_out_p)                         # f32 bias / LN params
        + 4 * tm_eff * D_emb * 4                            # f32 intermediates
    )
    vmem_limit = int(min(max(2 * vmem_needed, 32 * 1024 * 1024), 60 * 1024 * 1024))

    cost = pl.CostEstimate(
        flops=2 * M_pad * (D_in * D_emb + D_emb * D_out_p),
        transcendentals=M_pad * D_emb,
        bytes_accessed=(M_pad * (D_in + D_out_p) * isz
                        + (D_in * D_emb + D_emb * D_out_p) * wsz
                        + 4 * (3 * D_emb + D_out_p)),
    )

    out2d = pl.pallas_call(
        _top_layer_kernel,
        out_shape=jax.ShapeDtypeStruct((M_pad, D_out_p), features.dtype),
        grid_spec=pltpu.PrefetchScalarGridSpec(
            num_scalar_prefetch=0,
            grid=grid,
            in_specs=[
                pl.BlockSpec((tm_eff, D_in), lambda i: (i, 0)),   # x rows (streamed)
                full((D_in, D_emb)),                              # w1 (resident)
                full((1, D_emb)),                                 # b1 (f32)
                full((1, D_emb)),                                 # ln scale (f32)
                full((1, D_emb)),                                 # ln shift (f32)
                full((D_emb, D_out_p)),                           # w2 (padded, resident)
                full((1, D_out_p)),                               # b2 (f32, padded)
            ],
            out_specs=pl.BlockSpec((tm_eff, D_out_p), lambda i: (i, 0)),
        ),
        compiler_params=pltpu.CompilerParams(
            dimension_semantics=("parallel",),   # row axis shardable over v7x's 2 TCs
            vmem_limit_bytes=vmem_limit,
        ),
        cost_estimate=cost,
    )(x2d, w1, b1_2d, g_2d, beta_2d, w2p, b2_2d)

    return out2d[:M, :D_out].reshape(B, S, D_out)


def init_params(key, input_dim, embed_dim, output_dim, dtype=jnp.float32):
    """Deterministic synthetic parameter init (PyTorch-Linear-style uniform)."""
    k1, k2, k3, k4 = jax.random.split(key, 4)
    lim1 = 1.0 / math.sqrt(input_dim)
    lim2 = 1.0 / math.sqrt(embed_dim)
    return {
        "w1": jax.random.uniform(k1, (input_dim, embed_dim), dtype, -lim1, lim1),
        "b1": jax.random.uniform(k2, (embed_dim,), dtype, -lim1, lim1),
        "g": jnp.ones((embed_dim,), dtype),       # LayerNorm weight
        "beta": jnp.zeros((embed_dim,), dtype),   # LayerNorm bias
        "w2": jax.random.uniform(k3, (embed_dim, output_dim), dtype, -lim2, lim2),
        "b2": jax.random.uniform(k4, (output_dim,), dtype, -lim2, lim2),
    }


def top_layer_ref(features, params):
    """Pure-JAX reference mirroring the PyTorch forward."""
    x = features @ params["w1"] + params["b1"]
    x = 0.5 * x * (1.0 + lax.erf(x / jnp.sqrt(2.0)))
    mu = jnp.mean(x, axis=-1, keepdims=True)
    var = jnp.mean((x - mu) ** 2, axis=-1, keepdims=True)
    x = (x - mu) * lax.rsqrt(var + LN_EPS)
    x = x * params["g"] + params["beta"]
    return x @ params["w2"] + params["b2"]


if __name__ == "__main__":
    key = jax.random.PRNGKey(0)
    kx, kp, kx2 = jax.random.split(key, 3)

    # small shapes: batch=2, seq=8, input_dim=embed_dim=32, output_dim=16
    B, S = 2, 8
    input_dim, embed_dim, output_dim = 32, 32, 16
    features = jax.random.normal(kx, (B, S, input_dim), jnp.float32)
    params = init_params(kp, input_dim, embed_dim, output_dim)

    out = top_layer_pallas(features, params)
    out = jax.block_until_ready(out)
    ref = top_layer_ref(features, params)
    assert out.shape == (B, S, output_dim)
    assert jnp.allclose(out, ref, atol=1e-4, rtol=1e-4), "mismatch vs reference (small)"

    # second check: exercises multi-step grid, row padding and output slicing
    B2, S2 = 2, 200                       # M=400 -> padded to 512, grid of 2 tiles
    features2 = jax.random.normal(kx2, (B2, S2, input_dim), jnp.float32)
    out2 = top_layer_pallas(features2, params, tm=256)
    out2 = jax.block_until_ready(out2)
    ref2 = top_layer_ref(features2, params)
    assert out2.shape == (B2, S2, output_dim)
    assert jnp.allclose(out2, ref2, atol=1e-4, rtol=1e-4), "mismatch vs reference (tiled)"

    print("KERNEL_OK")
</pallas_src>

<mosaic_0001>
module attributes {stable_mosaic.version = 11 : i64} {
  func.func @_top_layer_kernel(%arg0: i32, %arg1: memref<16x32xf32, #tpu.memory_space<vmem>>, %arg2: memref<32x32xf32, #tpu.memory_space<vmem>>, %arg3: memref<1x32xf32, #tpu.memory_space<vmem>>, %arg4: memref<1x32xf32, #tpu.memory_space<vmem>>, %arg5: memref<1x32xf32, #tpu.memory_space<vmem>>, %arg6: memref<32x128xf32, #tpu.memory_space<vmem>>, %arg7: memref<1x128xf32, #tpu.memory_space<vmem>>, %arg8: memref<16x128xf32, #tpu.memory_space<vmem>>) attributes {dimension_semantics = [#tpu.dimension_semantics<parallel>], iteration_bounds = array<i64: 1>, scalar_prefetch = 0 : i64, scratch_operands = 0 : i64, tpu.core_type = #tpu.core_type<tc>, window_params = [{transform_indices = @transform_0, window_bounds = array<i64: 16, 32>}, {pipeline_mode = #tpu.pipeline_mode<synchronous>, transform_indices = @transform_1, window_bounds = array<i64: 32, 32>}, {pipeline_mode = #tpu.pipeline_mode<synchronous>, transform_indices = @transform_2, window_bounds = array<i64: 1, 32>}, {pipeline_mode = #tpu.pipeline_mode<synchronous>, transform_indices = @transform_3, window_bounds = array<i64: 1, 32>}, {pipeline_mode = #tpu.pipeline_mode<synchronous>, transform_indices = @transform_4, window_bounds = array<i64: 1, 32>}, {pipeline_mode = #tpu.pipeline_mode<synchronous>, transform_indices = @transform_5, window_bounds = array<i64: 32, 128>}, {pipeline_mode = #tpu.pipeline_mode<synchronous>, transform_indices = @transform_6, window_bounds = array<i64: 1, 128>}, {transform_indices = @transform_7, window_bounds = array<i64: 16, 128>}]} {
    %c0 = arith.constant 0 : index
    %c0_0 = arith.constant 0 : index
    %0 = vector.load %arg1[%c0, %c0_0] : memref<16x32xf32, #tpu.memory_space<vmem>>, vector<16x32xf32>
    %c0_1 = arith.constant 0 : index
    %c0_2 = arith.constant 0 : index
    %1 = vector.load %arg2[%c0_1, %c0_2] : memref<32x32xf32, #tpu.memory_space<vmem>>, vector<32x32xf32>
    %cst = arith.constant dense<0.000000e+00> : vector<16x32xf32>
    %2 = tpu.matmul %0, %1, %cst {dimension_numbers = #tpu.dot_dimension_numbers<[1], [0], [0], [1], [0, 0, 1, 1], [], []>} : vector<16x32xf32>, vector<32x32xf32>, vector<16x32xf32> -> vector<16x32xf32>
    %c0_3 = arith.constant 0 : index
    %c0_4 = arith.constant 0 : index
    %3 = vector.load %arg3[%c0_3, %c0_4] : memref<1x32xf32, #tpu.memory_space<vmem>>, vector<1x32xf32>
    %4 = vector.broadcast %3 : vector<1x32xf32> to vector<16x32xf32>
    %5 = arith.addf %2, %4 : vector<16x32xf32>
    %cst_5 = arith.constant 5.000000e-01 : f32
    %6 = vector.broadcast %cst_5 : f32 to vector<16x32xf32>
    %7 = arith.mulf %6, %5 : vector<16x32xf32>
    %cst_6 = arith.constant 0.707106769 : f32
    %8 = vector.broadcast %cst_6 : f32 to vector<16x32xf32>
    %9 = arith.mulf %5, %8 : vector<16x32xf32>
    %10 = math.erf %9 : vector<16x32xf32>
    %cst_7 = arith.constant 1.000000e+00 : f32
    %11 = vector.broadcast %cst_7 : f32 to vector<16x32xf32>
    %12 = arith.addf %11, %10 : vector<16x32xf32>
    %13 = arith.mulf %7, %12 : vector<16x32xf32>
    %cst_8 = arith.constant dense<0.000000e+00> : vector<16xf32>
    %14 = vector.multi_reduction <add>, %13, %cst_8 [1] : vector<16x32xf32> to vector<16xf32>
    %15 = vector.shape_cast %14 : vector<16xf32> to vector<16x1xf32>
    %cst_9 = arith.constant 3.200000e+01 : f32
    %16 = vector.broadcast %cst_9 : f32 to vector<16x1xf32>
    %17 = arith.divf %15, %16 : vector<16x1xf32>
    %18 = vector.broadcast %17 : vector<16x1xf32> to vector<16x32xf32>
    %19 = arith.subf %13, %18 : vector<16x32xf32>
    %20 = arith.mulf %19, %19 : vector<16x32xf32>
    %cst_10 = arith.constant dense<0.000000e+00> : vector<16xf32>
    %21 = vector.multi_reduction <add>, %20, %cst_10 [1] : vector<16x32xf32> to vector<16xf32>
    %22 = vector.shape_cast %21 : vector<16xf32> to vector<16x1xf32>
    %cst_11 = arith.constant 3.200000e+01 : f32
    %23 = vector.broadcast %cst_11 : f32 to vector<16x1xf32>
    %24 = arith.divf %22, %23 : vector<16x1xf32>
    %cst_12 = arith.constant 9.99999996E-13 : f32
    %25 = vector.broadcast %cst_12 : f32 to vector<16x1xf32>
    %26 = arith.addf %24, %25 : vector<16x1xf32>
    %27 = math.rsqrt %26 : vector<16x1xf32>
    %28 = vector.broadcast %27 : vector<16x1xf32> to vector<16x32xf32>
    %29 = arith.mulf %19, %28 : vector<16x32xf32>
    %c0_13 = arith.constant 0 : index
    %c0_14 = arith.constant 0 : index
    %30 = vector.load %arg4[%c0_13, %c0_14] : memref<1x32xf32, #tpu.memory_space<vmem>>, vector<1x32xf32>
    %31 = vector.broadcast %30 : vector<1x32xf32> to vector<16x32xf32>
    %32 = arith.mulf %29, %31 : vector<16x32xf32>
    %c0_15 = arith.constant 0 : index
    %c0_16 = arith.constant 0 : index
    %33 = vector.load %arg5[%c0_15, %c0_16] : memref<1x32xf32, #tpu.memory_space<vmem>>, vector<1x32xf32>
    %34 = vector.broadcast %33 : vector<1x32xf32> to vector<16x32xf32>
    %35 = arith.addf %32, %34 : vector<16x32xf32>
    %c0_17 = arith.constant 0 : index
    %c0_18 = arith.constant 0 : index
    %36 = vector.load %arg6[%c0_17, %c0_18] : memref<32x128xf32, #tpu.memory_space<vmem>>, vector<32x128xf32>
    %cst_19 = arith.constant dense<0.000000e+00> : vector<16x128xf32>
    %37 = tpu.matmul %35, %36, %cst_19 {dimension_numbers = #tpu.dot_dimension_numbers<[1], [0], [0], [1], [0, 0, 1, 1], [], []>} : vector<16x32xf32>, vector<32x128xf32>, vector<16x128xf32> -> vector<16x128xf32>
    %c0_20 = arith.constant 0 : index
    %c0_21 = arith.constant 0 : index
    %38 = vector.load %arg7[%c0_20, %c0_21] : memref<1x128xf32, #tpu.memory_space<vmem>>, vector<1x128xf32>
    %39 = vector.broadcast %38 : vector<1x128xf32> to vector<16x128xf32>
    %40 = arith.addf %37, %39 : vector<16x128xf32>
    %c0_22 = arith.constant 0 : index
    %c0_23 = arith.constant 0 : index
    %41 = vector.load %arg8[%c0_22, %c0_23] : memref<16x128xf32, #tpu.memory_space<vmem>>, vector<16x128xf32>
    tpu.vector_store %arg8[%c0_22, %c0_23], %40 {strides = array<i32>} : memref<16x128xf32, #tpu.memory_space<vmem>>, vector<16x128xf32>,
    return
  }
  func.func @transform_0(%arg0: i32) -> (i32, i32) {
    %c0_i32 = arith.constant 0 : i32
    %c0_i32_0 = arith.constant 0 : i32
    return %arg0, %c0_i32 : i32, i32
  }
  func.func @transform_1(%arg0: i32) -> (i32, i32) {
    %c0_i32 = arith.constant 0 : i32
    %c0_i32_0 = arith.constant 0 : i32
    %c0_i32_1 = arith.constant 0 : i32
    return %c0_i32, %c0_i32_0 : i32, i32
  }
  func.func @transform_2(%arg0: i32) -> (i32, i32) {
    %c0_i32 = arith.constant 0 : i32
    %c0_i32_0 = arith.constant 0 : i32
    %c0_i32_1 = arith.constant 0 : i32
    return %c0_i32, %c0_i32_0 : i32, i32
  }
  func.func @transform_3(%arg0: i32) -> (i32, i32) {
    %c0_i32 = arith.constant 0 : i32
    %c0_i32_0 = arith.constant 0 : i32
    %c0_i32_1 = arith.constant 0 : i32
    return %c0_i32, %c0_i32_0 : i32, i32
  }
  func.func @transform_4(%arg0: i32) -> (i32, i32) {
    %c0_i32 = arith.constant 0 : i32
    %c0_i32_0 = arith.constant 0 : i32
    %c0_i32_1 = arith.constant 0 : i32
    return %c0_i32, %c0_i32_0 : i32, i32
  }
  func.func @transform_5(%arg0: i32) -> (i32, i32) {
    %c0_i32 = arith.constant 0 : i32
    %c0_i32_0 = arith.constant 0 : i32
    %c0_i32_1 = arith.constant 0 : i32
    return %c0_i32, %c0_i32_0 : i32, i32
  }
  func.func @transform_6(%arg0: i32) -> (i32, i32) {
    %c0_i32 = arith.constant 0 : i32
    %c0_i32_0 = arith.constant 0 : i32
    %c0_i32_1 = arith.constant 0 : i32
    return %c0_i32, %c0_i32_0 : i32, i32
  }
  func.func @transform_7(%arg0: i32) -> (i32, i32) {
    %c0_i32 = arith.constant 0 : i32
    %c0_i32_0 = arith.constant 0 : i32
    return %arg0, %c0_i32 : i32, i32
  }
}

</mosaic_0001>

<llo_original>
// kernel: tpu_custom_call.1
$region0: #{tpu_custom_call.1}
  #allocation0 [shape = 'u32[]', space=smem, size = 0x4, offset = 0x4, fixed_abs, tag = 'smem constant byte address 0x4 - core index']
  #allocation1 [shape = 'u32[72,128]{1,0:T(1,128)}', space=vmem, size = 0x9000, scoped, tag = 'internal scratch']
  %s0 = inlined_call_operand.hbm [shape: f32[16,32], index: 0, kind: input, shape index: {}]
  %s1 = inlined_call_operand.hbm [shape: f32[32,32], index: 1, kind: input, shape index: {}]
  %s2 = inlined_call_operand.vmem [shape: f32[1,32], index: 2, kind: input, shape index: {}]
  %s3 = inlined_call_operand.vmem [shape: f32[1,32], index: 3, kind: input, shape index: {}]
  %s4 = inlined_call_operand.vmem [shape: f32[1,32], index: 4, kind: input, shape index: {}]
  %s5 = inlined_call_operand.hbm [shape: f32[32,128], index: 5, kind: input, shape index: {}]
  %s6 = inlined_call_operand.vmem [shape: f32[1,128], index: 6, kind: input, shape index: {}]
  %s7 = inlined_call_operand.hbm [shape: f32[16,128], index: 7, kind: output, shape index: {}]
  %s8 = sld [smem:[#allocation0]]
  $region50: #{tpu_custom_call.1} parent=0
    _
  %s10 = ssub.s32 1, %s8
  %s11 = scalar_select 0, %s10, %s8
  $region1: #{tpu_custom_call.1} parent=0
    #allocation2 [shape = 'u8[8192]{0}', space=vmem, size = 0x2000, scoped, tag = 'input window, operand 0, single buffered']
    #allocation3 [shape = 's32[1]{0}', space=sflag, size = 0x4, scoped, tag = 'scoped memory for tpu_custom_call.1']
    #allocation4 [shape = 's32[1]{0}', space=sflag, size = 0x4, scoped, tag = 'scoped memory for tpu_custom_call.1']
    #allocation5 [shape = 'u8[16384]{0}', space=vmem, size = 0x4000, scoped, tag = 'input window, operand 1, single buffered']
    #allocation6 [shape = 's32[1]{0}', space=sflag, size = 0x4, scoped, tag = 'scoped memory for tpu_custom_call.1']
    #allocation7 [shape = 'u8[16384]{0}', space=vmem, size = 0x4000, scoped, tag = 'input window, operand 5, single buffered']
    #allocation8 [shape = 'u8[8192]{0}', space=vmem, size = 0x2000, scoped, tag = 'output window, operand 0, single buffered']
    %12 = vsyncpa [#allocation3], 0
    %13 = vsyncpa [#allocation6], 0
    %14 = vsyncpa [#allocation4], 0
    // Predicated region
    $region2: #{tpu_custom_call.1} parent=1 // pred_check
      _
    $region3: #{tpu_custom_call.1} parent=1 // pred_check_branch
      %16 = sbr.rel (0) target = $region5
    $region4: #{tpu_custom_call.1} parent=1 // pred_region
      %18 = vsyncadd [#allocation3], 0
      %s19 = sshll.u32 %s0, 4
      %s20 = int_to_ptr.hbm [resolvable:$true] %s19
      %s21 = sshll.u32 [#allocation2], 4
      %s22 = int_to_ptr.vmem [resolvable:$true] %s21
      %27 = dma.hbm_to_vmem [thread:$0]  %s20, 256, %s22, [#allocation3], 128, 128, 8
    $region5: #{tpu_custom_call.1} parent=1 // pred_fallthru
      _
    // Predicated region
    $region6: #{tpu_custom_call.1} parent=1 // pred_check
      _
    $region7: #{tpu_custom_call.1} parent=1 // pred_check_branch
      %29 = sbr.rel (0) target = $region9
    $region8: #{tpu_custom_call.1} parent=1 // pred_region
      %31 = vsyncadd [#allocation6], 0
      %s32 = sshll.u32 %s1, 4
      %s33 = int_to_ptr.hbm [resolvable:$true] %s32
      %s34 = sshll.u32 [#allocation5], 4
      %s35 = int_to_ptr.vmem [resolvable:$true] %s34
      %40 = dma.hbm_to_vmem [thread:$0]  %s33, 512, %s35, [#allocation6], 128, 128, 8
    $region9: #{tpu_custom_call.1} parent=1 // pred_fallthru
      _
    // Predicated region
    $region10: #{tpu_custom_call.1} parent=1 // pred_check
      _
    $region11: #{tpu_custom_call.1} parent=1 // pred_check_branch
      %42 = sbr.rel (0) target = $region13
    $region12: #{tpu_custom_call.1} parent=1 // pred_region
      _
    $region13: #{tpu_custom_call.1} parent=1 // pred_fallthru
      _
    // Predicated region
    $region14: #{tpu_custom_call.1} parent=1 // pred_check
      _
    $region15: #{tpu_custom_call.1} parent=1 // pred_check_branch
      %44 = sbr.rel (0) target = $region17
    $region16: #{tpu_custom_call.1} parent=1 // pred_region
      _
    $region17: #{tpu_custom_call.1} parent=1 // pred_fallthru
      _
    // Predicated region
    $region18: #{tpu_custom_call.1} parent=1 // pred_check
      _
    $region19: #{tpu_custom_call.1} parent=1 // pred_check_branch
      %46 = sbr.rel (0) target = $region21
    $region20: #{tpu_custom_call.1} parent=1 // pred_region
      _
    $region21: #{tpu_custom_call.1} parent=1 // pred_fallthru
      _
    // Predicated region
    $region22: #{tpu_custom_call.1} parent=1 // pred_check
      _
    $region23: #{tpu_custom_call.1} parent=1 // pred_check_branch
      %48 = sbr.rel (0) target = $region25
    $region24: #{tpu_custom_call.1} parent=1 // pred_region
      %50 = vsyncadd [#allocation6], 0
      %s51 = sshll.u32 %s5, 4
      %s52 = int_to_ptr.hbm [resolvable:$true] %s51
      %s53 = sshll.u32 [#allocation7], 4
      %s54 = int_to_ptr.vmem [resolvable:$true] %s53
      %59 = dma.hbm_to_vmem [thread:$0]  %s52, 512, %s54, [#allocation6], 128, 128, 8
    $region25: #{tpu_custom_call.1} parent=1 // pred_fallthru
      _
    // Predicated region
    $region26: #{tpu_custom_call.1} parent=1 // pred_check
      _
    $region27: #{tpu_custom_call.1} parent=1 // pred_check_branch
      %61 = sbr.rel (0) target = $region29
    $region28: #{tpu_custom_call.1} parent=1 // pred_region
      _
    $region29: #{tpu_custom_call.1} parent=1 // pred_fallthru
      _
    // Predicated region
    $region30: #{tpu_custom_call.1} parent=1 // pred_check
      _
    $region31: #{tpu_custom_call.1} parent=1 // pred_check_branch
      %63 = sbr.rel (0) target = $region33
    $region32: #{tpu_custom_call.1} parent=1 // pred_region
      %65 = dma.done [#allocation3], 256
    $region33: #{tpu_custom_call.1} parent=1 // pred_fallthru
      _
    // Predicated region
    $region34: #{tpu_custom_call.1} parent=1 // pred_check
      _
    $region35: #{tpu_custom_call.1} parent=1 // pred_check_branch
      %67 = sbr.rel (0) target = $region37
    $region36: #{tpu_custom_call.1} parent=1 // pred_region
      %69 = dma.done [#allocation6], 512
    $region37: #{tpu_custom_call.1} parent=1 // pred_fallthru
      _
    // Predicated region
    $region38: #{tpu_custom_call.1} parent=1 // pred_check
      _
    $region39: #{tpu_custom_call.1} parent=1 // pred_check_branch
      %71 = sbr.rel (0) target = $region41
    $region40: #{tpu_custom_call.1} parent=1 // pred_region
      %73 = dma.done [#allocation6], 512
    $region41: #{tpu_custom_call.1} parent=1 // pred_fallthru
      _
    %v74 = vld [vmem:[#allocation2] sm:$0xff]
    %v75 = vld [vmem:[#allocation2 + $0x8] sm:$0xff]
    %v76 = vld [vmem:[#allocation5] sm:$0xff]
    %v77 = vld [vmem:[#allocation5 + $0x8] sm:$0xff]
    %v78 = vld [vmem:[#allocation5 + $0x10] sm:$0xff]
    %v79 = vld [vmem:[#allocation5 + $0x18] sm:$0xff]
    %v80 = vld [vmem:[%s2] sm:$0x1]
    %v82 = vperm.slane %v80, 0
    %vm84 = vcmask 261120
    %v86 = vsel %vm84, %v74, 0
    %v89 = vsel %vm84, %v75, 0
    %91 = vmatpush.msra.mxu0 0.0
    %92 = vmatpush.msra.mxu0 0.0
    %93 = vmatpush.msra.mxu0 0.0
    %94 = vmatpush.msra.mxu0 0.0
    %95 = vmatpush.msra.mxu0 0.0
    %96 = vmatpush.msra.mxu0 0.0
    %97 = vmatpush.msra.mxu0 0.0
    %98 = vmatpush.msra.mxu0 0.0
    %99 = vmatpush.msra.mxu0 0.0
    %100 = vmatpush.msra.mxu0 0.0
    %101 = vmatpush.msra.mxu0 0.0
    %102 = vmatpush.msra.mxu0 0.0
    %103 = vmatpush.msra.mxu0 %v79
    %104 = vmatpush.msra.mxu0 %v78
    %105 = vmatpush.msra.mxu0 %v77
    %106 = vmatpush.msra.mxu0 %v76
    %107 = vmatmul.f32.gmra.mxu0 %v86
    %v108 = vpop.f32.mrf.mxu0
    %v109 = vadd.f32 %v82, %v108
    %110 = vmatmul.f32.gmra.mxu0 %v89
    %v111 = vpop.f32.mrf.mxu0
    %v112 = vadd.f32 %v82, %v111
    %113 = vdwg.mxu0
    %v114 = vmul.f32 %v109, 0.5
    %v115 = vmul.f32 %v112, 0.5
    %v116 = vmul.f32 %v109, 0.70710677
    %v117 = vmul.f32 %v112, 0.70710677
    %v118 = vmul.f32 %v116, %v116
    %v119 = vmin.f32 16.0, %v118
    %v120 = vmul.f32 %v119, 2.1237322e-06
    %v121 = vadd.f32 %v120, 0.00028619796
    %v122 = vmul.f32 %v119, %v121
    %v123 = vadd.f32 %v122, 0.0036580483
    %v124 = vmul.f32 %v119, %v123
    %v125 = vadd.f32 %v124, 0.05243302
    %v126 = vmul.f32 %v119, %v125
    %v127 = vadd.f32 %v126, 0.18741608
    %v128 = vmul.f32 %v119, %v127
    %v129 = vadd.f32 %v128, 1.1283791
    %v130 = vmul.f32 %v116, %v129
    %v131 = vmul.f32 %v119, 3.8918573e-05
    %v132 = vadd.f32 %v131, 0.001143296
    %v133 = vmul.f32 %v119, %v132
    %v134 = vadd.f32 %v133, 0.014752088
    %v135 = vmul.f32 %v119, %v134
    %v136 = vadd.f32 %v135, 0.112945676
    %v137 = vmul.f32 %v119, %v136
    %v138 = vadd.f32 %v137, 0.4994258
    %v139 = vmul.f32 %v119, %v138
    %v140 = vadd.f32 %v139, 1.0
    %v141 = vrcp.pop %v140
    %v142 = vmul.f32 %v140, %v141
    %v143 = vsub.f32 1.0, %v142
    %v144 = vmul.f32 %v141, %v143
    %v145 = vadd.f32 %v141, %v144
    %vm146 = vweird.f32 %v140
    %vm147 = vweird.f32 %v141
    %vm148 = vmor %vm146, %vm147
    %v149 = vsel %vm148, %v141, %v145
    %v150 = vand.u32 2147483647, %v140
    %vm151 = vcmp.eq.f32.partialorder %v150, 8.507059e+37
    %v152 = vand.u32 %v140, 2147483648
    %v153 = vor.u32 1.1754944e-38, %v152
    %v154 = vsel %vm151, %v153, %v149
    %v155 = vmul.f32 %v130, %v154
    %v156 = vmin.f32 %v155, 1.0
    %v157 = vmax.f32 %v156, -1.0
    %v158 = vmul.f32 %v117, %v117
    %v159 = vmin.f32 16.0, %v158
    %v160 = vmul.f32 %v159, 2.1237322e-06
    %v161 = vadd.f32 %v160, 0.00028619796
    %v162 = vmul.f32 %v159, %v161
    %v163 = vadd.f32 %v162, 0.0036580483
    %v164 = vmul.f32 %v159, %v163
    %v165 = vadd.f32 %v164, 0.05243302
    %v166 = vmul.f32 %v159, %v165
    %v167 = vadd.f32 %v166, 0.18741608
    %v168 = vmul.f32 %v159, %v167
    %v169 = vadd.f32 %v168, 1.1283791
    %v170 = vmul.f32 %v117, %v169
    %v171 = vmul.f32 %v159, 3.8918573e-05
    %v172 = vadd.f32 %v171, 0.001143296
    %v173 = vmul.f32 %v159, %v172
    %v174 = vadd.f32 %v173, 0.014752088
    %v175 = vmul.f32 %v159, %v174
    %v176 = vadd.f32 %v175, 0.112945676
    %v177 = vmul.f32 %v159, %v176
    %v178 = vadd.f32 %v177, 0.4994258
    %v179 = vmul.f32 %v159, %v178
    %v180 = vadd.f32 %v179, 1.0
    %v181 = vrcp.pop %v180
    %v182 = vmul.f32 %v180, %v181
    %v183 = vsub.f32 1.0, %v182
    %v184 = vmul.f32 %v181, %v183
    %v185 = vadd.f32 %v181, %v184
    %vm186 = vweird.f32 %v180
    %vm187 = vweird.f32 %v181
    %vm188 = vmor %vm186, %vm187
    %v189 = vsel %vm188, %v181, %v185
    %v190 = vand.u32 2147483647, %v180
    %vm191 = vcmp.eq.f32.partialorder %v190, 8.507059e+37
    %v192 = vand.u32 %v180, 2147483648
    %v193 = vor.u32 1.1754944e-38, %v192
    %v194 = vsel %vm191, %v193, %v189
    %v195 = vmul.f32 %v170, %v194
    %v196 = vmin.f32 %v195, 1.0
    %v197 = vmax.f32 %v196, -1.0
    %v198 = vadd.f32 %v157, 1.0
    %v199 = vadd.f32 %v197, 1.0
    %v200 = vmul.f32 %v114, %v198
    %v201 = vmul.f32 %v115, %v199
    %v202 = vsel %vm84, %v200, 0.0
    %203 = vadd.xlane.f32.xlu0 %v202
    %v204 = vpop.xlane.xlu0 %203
    %v205 = vsel %vm84, %v201, 0.0
    %206 = vadd.xlane.f32.xlu0 %v205
    %v207 = vpop.xlane.xlu0 %206
    %v208 = vrcp.pop 32.0
    %v209 = vmul.f32 32.0, %v208
    %v210 = vsub.f32 1.0, %v209
    %v211 = vmul.f32 %v208, %v210
    %v212 = vadd.f32 %v208, %v211
    %vm213 = vweird.f32 %v208
    %v214 = vsel %vm213, %v208, %v212
    %v215 = vmul.f32 %v204, %v214
    %v216 = vmul.f32 %v207, %v214
    %v217 = vsub.f32 %v200, %v215
    %v218 = vsub.f32 %v201, %v216
    %v219 = vmul.f32 %v217, %v217
    %v220 = vmul.f32 %v218, %v218
    %v221 = vsel %vm84, %v219, 0.0
    %222 = vadd.xlane.f32.xlu0 %v221
    %v223 = vpop.xlane.xlu0 %222
    %v224 = vsel %vm84, %v220, 0.0
    %225 = vadd.xlane.f32.xlu0 %v224
    %v226 = vpop.xlane.xlu0 %225
    %v227 = vmul.f32 %v223, %v214
    %v228 = vmul.f32 %v226, %v214
    %v229 = vadd.f32 %v227, 1e-12
    %v230 = vadd.f32 %v228, 1e-12
    %v231 = vrsqrt.pop %v229
    %v232 = vmul.f32 %v231, %v229
    %v233 = vmul.f32 %v232, %v231
    %v234 = vmul.f32 0.5, %v233
    %v235 = vsub.f32 1.5, %v234
    %v236 = vmul.f32 %v231, %v235
    %vm237 = vweird.f32 %v229
    %vm238 = vweird.f32 %v231
    %vm239 = vmor %vm237, %vm238
    %v240 = vsel %vm239, %v231, %v236
    %v241 = vrsqrt.pop %v230
    %v242 = vmul.f32 %v241, %v230
    %v243 = vmul.f32 %v242, %v241
    %v244 = vmul.f32 0.5, %v243
    %v245 = vsub.f32 1.5, %v244
    %v246 = vmul.f32 %v241, %v245
    %vm247 = vweird.f32 %v230
    %vm248 = vweird.f32 %v241
    %vm249 = vmor %vm247, %vm248
    %v250 = vsel %vm249, %v241, %v246
    %v251 = vmul.f32 %v217, %v240
    %v252 = vmul.f32 %v218, %v250
    %v253 = vld [vmem:[%s3] sm:$0x1]
    %v255 = vperm.slane %v253, 0
    %v257 = vmul.f32 %v251, %v255
    %v258 = vmul.f32 %v252, %v255
    %v259 = vld [vmem:[%s4] sm:$0x1]
    %v261 = vperm.slane %v259, 0
    %v263 = vadd.f32 %v257, %v261
    %v264 = vadd.f32 %v258, %v261
    %v265 = vld [vmem:[#allocation7] sm:$0xff]
    %v266 = vld [vmem:[#allocation7 + $0x8] sm:$0xff]
    %v267 = vld [vmem:[#allocation7 + $0x10] sm:$0xff]
    %v268 = vld [vmem:[#allocation7 + $0x18] sm:$0xff]
    %v269 = vld [vmem:[%s6] sm:$0x1]
    %v271 = vperm.slane %v269, 0
    %v274 = vsel %vm84, %v263, 0
    %v277 = vsel %vm84, %v264, 0
    %279 = vmatpush.msra.mxu0 0.0
    %280 = vmatpush.msra.mxu0 0.0
    %281 = vmatpush.msra.mxu0 0.0
    %282 = vmatpush.msra.mxu0 0.0
    %283 = vmatpush.msra.mxu0 0.0
    %284 = vmatpush.msra.mxu0 0.0
    %285 = vmatpush.msra.mxu0 0.0
    %286 = vmatpush.msra.mxu0 0.0
    %287 = vmatpush.msra.mxu0 0.0
    %288 = vmatpush.msra.mxu0 0.0
    %289 = vmatpush.msra.mxu0 0.0
    %290 = vmatpush.msra.mxu0 0.0
    %291 = vmatpush.msra.mxu0 %v268
    %292 = vmatpush.msra.mxu0 %v267
    %293 = vmatpush.msra.mxu0 %v266
    %294 = vmatpush.msra.mxu0 %v265
    %295 = vmatmul.f32.gmra.mxu0 %v274
    %v296 = vpop.f32.mrf.mxu0
    %v297 = vadd.f32 %v271, %v296
    %298 = vmatmul.f32.gmra.mxu0 %v277
    %v299 = vpop.f32.mrf.mxu0
    %v300 = vadd.f32 %v271, %v299
    %301 = vdwg.mxu0
    %302 = vst [vmem:[#allocation8] sm:$0xff] %v297
    %303 = vst [vmem:[#allocation8 + $0x8] sm:$0xff] %v300
    // Predicated region
    $region42: #{tpu_custom_call.1} parent=1 // pred_check
      _
    $region43: #{tpu_custom_call.1} parent=1 // pred_check_branch
      %305 = sbr.rel (0) target = $region45
    $region44: #{tpu_custom_call.1} parent=1 // pred_region
      %307 = vsyncadd [#allocation4], 0
      %s308 = sshll.u32 [#allocation8], 4
      %s309 = int_to_ptr.vmem [resolvable:$true] %s308
      %s310 = sshll.u32 %s7, 4
      %s311 = int_to_ptr.hbm [resolvable:$true] %s310
      %316 = dma.vmem_to_hbm [thread:$0]  %s309, 256, %s311, [#allocation4], 128, 128, 8
    $region45: #{tpu_custom_call.1} parent=1 // pred_fallthru
      _
    // Predicated region
    $region46: #{tpu_custom_call.1} parent=1 // pred_check
      _
    $region47: #{tpu_custom_call.1} parent=1 // pred_check_branch
      %318 = sbr.rel (0) target = $region49
    $region48: #{tpu_custom_call.1} parent=1 // pred_region
      %320 = dma.done [#allocation4], 256
    $region49: #{tpu_custom_call.1} parent=1 // pred_fallthru
      _
    %321 = vsyncpa [#allocation3], 1
    %322 = vsyncpa [#allocation6], 1
    %323 = vsyncpa [#allocation4], 1

</llo_original>
